<compile_context>
chip_gen: v7x
topology: tpu7x:2x2x1
jax: 0.10.0
libtpu: 0.0.40
codegen_flags: <defaults>
</compile_context>

<pallas_src>
import functools

import jax
import jax.numpy as jnp
from jax.experimental import pallas as pl
from jax.experimental.pallas import tpu as pltpu

_LANE = 128
_MIB = 1024 * 1024


def _negabs_kernel(x_ref, o_ref):
    o_ref[...] = -jnp.abs(x_ref[...])


def _round_up(a: int, b: int) -> int:
    return -(-a // b) * b


@functools.lru_cache(maxsize=1)
def _hw_params():
    """Return (target_block_bytes, vmem_limit_bytes, tensorcores_per_chip)."""
    vmem_cap = None
    try:
        info = pltpu.get_tpu_info()
        for attr in ("vmem_capacity_bytes", "vmem_size_bytes", "vmem_bytes"):
            val = getattr(info, attr, None)
            if val:
                vmem_cap = int(val)
                break
    except Exception:
        vmem_cap = None
    if vmem_cap is None:
        try:
            kind = jax.devices()[0].device_kind.lower()
        except Exception:
            kind = ""
        if kind and "v7" not in kind:
            vmem_cap = 128 * _MIB          # v5e / v6e class
        else:
            vmem_cap = 64 * _MIB           # v7x class, or unknown -> conservative
    if vmem_cap <= 64 * _MIB:
        # v7x: 64 MiB physical VMEM per TC, 2 TCs per chip.
        return 6 * _MIB, 40 * _MIB, 2
    # v5e / v6e: 128 MiB physical VMEM, 1 TC per chip.
    return 8 * _MIB, 48 * _MIB, 1


def _negabs_2d(x2d: jax.Array) -> jax.Array:
    """Run the kernel over a (rows, 128) lane-dense slab."""
    rows, lane = x2d.shape
    itemsize = jnp.dtype(x2d.dtype).itemsize
    # Minimum packed sublane tile: 8 (4-byte), 16 (2-byte), 32 (1-byte dtypes).
    sublane_min = max(8, 32 // itemsize)

    block_bytes, vmem_limit, n_cores = _hw_params()

    max_rows_per_block = max(block_bytes // (lane * itemsize), sublane_min)
    max_rows_per_block = _round_up(max_rows_per_block, sublane_min)

    if rows <= sublane_min:
        tile_rows = rows                     # full-extent block; always legal
    else:
        tile_rows = min(max_rows_per_block, _round_up(rows, sublane_min))
        if n_cores > 1 and rows >= 2 * n_cores * sublane_min:
            # >=2 grid steps per TensorCore so each core keeps double-buffering.
            target_steps = 2 * n_cores
            tile_rows = min(
                tile_rows, _round_up(pl.cdiv(rows, target_steps), sublane_min))
            # Best-effort even grid count so the two cores stay balanced.
            steps = pl.cdiv(rows, tile_rows)
            if steps > 1 and steps % n_cores:
                steps = _round_up(steps, n_cores)
                tile_rows = max(
                    sublane_min, _round_up(pl.cdiv(rows, steps), sublane_min))

    grid = (pl.cdiv(rows, tile_rows),)       # Pallas masks the partial tail block

    return pl.pallas_call(
        _negabs_kernel,
        out_shape=jax.ShapeDtypeStruct((rows, lane), x2d.dtype),
        grid=grid,
        in_specs=[pl.BlockSpec((tile_rows, lane), lambda i: (i, 0))],
        out_specs=pl.BlockSpec((tile_rows, lane), lambda i: (i, 0)),
        compiler_params=pltpu.CompilerParams(
            dimension_semantics=("parallel",),
            vmem_limit_bytes=vmem_limit,
        ),
    )(x2d)


def negabs(x: jax.Array) -> jax.Array:
    """Elementwise -abs(x) (NegAbs.forward), computed in a Pallas TPU kernel."""
    # Note: unsigned/bool dtypes wrap mod 2^k here, whereas PyTorch's neg
    # rejects them; signed-int min wraps identically to torch's semantics.
    orig_shape = x.shape
    n = x.size
    if n == 0:
        return x

    x_flat = x.reshape(-1)
    rem = n % _LANE
    if rem == 0:
        # Aligned fast path: free 2D view, no pad, no slice.
        out2d = _negabs_2d(x_flat.reshape(n // _LANE, _LANE))
        return out2d.reshape(orig_shape)

    # Ragged path: kernel over the aligned prefix, plain jnp for the tiny tail.
    main_n = n - rem
    tail = -jnp.abs(x_flat[main_n:])
    if main_n == 0:
        # Whole array is smaller than one lane row; not worth a kernel launch.
        return tail.reshape(orig_shape)
    out_main = _negabs_2d(x_flat[:main_n].reshape(main_n // _LANE, _LANE))
    return jnp.concatenate([out_main.reshape(-1), tail]).reshape(orig_shape)


if __name__ == "__main__":
    key = jax.random.PRNGKey(0)

    # Main test: NCHW tensor, size is a multiple of 128 -> aligned fast path.
    x = jax.random.normal(key, (2, 4, 16, 16), dtype=jnp.float32)
    y = negabs(x)
    jax.block_until_ready(y)
    assert y.shape == x.shape and y.dtype == x.dtype
    assert jnp.allclose(y, -jnp.abs(x)), "mismatch vs reference (aligned f32)"

    # bf16 aligned path (exercises the 16-row packed-sublane floor).
    xb = jax.random.normal(jax.random.PRNGKey(2), (2, 4, 16, 16), dtype=jnp.bfloat16)
    yb = negabs(xb)
    jax.block_until_ready(yb)
    assert yb.shape == xb.shape and yb.dtype == xb.dtype
    assert jnp.array_equal(yb, -jnp.abs(xb)), "mismatch vs reference (aligned bf16)"

    # Ragged test: 175 elems -> 128-elem kernel prefix + 47-elem jnp tail.
    xr = jax.random.normal(jax.random.PRNGKey(1), (5, 7, 5), dtype=jnp.float32)
    yr = negabs(xr)
    jax.block_until_ready(yr)
    assert yr.shape == xr.shape and yr.dtype == xr.dtype
    assert jnp.allclose(yr, -jnp.abs(xr)), "mismatch vs reference (ragged)"

    # Tiny test: 105 elems (< one lane row) -> pure tail path.
    xt = jax.random.normal(jax.random.PRNGKey(3), (3, 5, 7), dtype=jnp.float32)
    yt = negabs(xt)
    jax.block_until_ready(yt)
    assert jnp.allclose(yt, -jnp.abs(xt)), "mismatch vs reference (tiny)"

    print("KERNEL_OK")
</pallas_src>

<mosaic_0001>
module attributes {stable_mosaic.version = 11 : i64} {
  func.func @_negabs_kernel(%arg0: i32, %arg1: memref<16x128xf32, #tpu.memory_space<vmem>>, %arg2: memref<16x128xf32, #tpu.memory_space<vmem>>) attributes {dimension_semantics = [#tpu.dimension_semantics<parallel>], iteration_bounds = array<i64: 1>, scalar_prefetch = 0 : i64, scratch_operands = 0 : i64, tpu.core_type = #tpu.core_type<tc>, window_params = [{transform_indices = @transform_0, window_bounds = array<i64: 16, 128>}, {transform_indices = @transform_1, window_bounds = array<i64: 16, 128>}]} {
    %c0 = arith.constant 0 : index
    %c0_0 = arith.constant 0 : index
    %0 = vector.load %arg1[%c0, %c0_0] : memref<16x128xf32, #tpu.memory_space<vmem>>, vector<16x128xf32>
    %1 = math.absf %0 : vector<16x128xf32>
    %cst = arith.constant 0.000000e+00 : f32
    %2 = vector.broadcast %cst : f32 to vector<16x128xf32>
    %3 = arith.subf %2, %1 : vector<16x128xf32>
    %c0_1 = arith.constant 0 : index
    %c0_2 = arith.constant 0 : index
    %4 = vector.load %arg2[%c0_1, %c0_2] : memref<16x128xf32, #tpu.memory_space<vmem>>, vector<16x128xf32>
    tpu.vector_store %arg2[%c0_1, %c0_2], %3 {strides = array<i32>} : memref<16x128xf32, #tpu.memory_space<vmem>>, vector<16x128xf32>,
    return
  }
  func.func @transform_0(%arg0: i32) -> (i32, i32) {
    %c0_i32 = arith.constant 0 : i32
    %c0_i32_0 = arith.constant 0 : i32
    return %arg0, %c0_i32 : i32, i32
  }
  func.func @transform_1(%arg0: i32) -> (i32, i32) {
    %c0_i32 = arith.constant 0 : i32
    %c0_i32_0 = arith.constant 0 : i32
    return %arg0, %c0_i32 : i32, i32
  }
}

</mosaic_0001>

<llo_original>
// kernel: tpu_custom_call.1
$region0: #{tpu_custom_call.1}
  #allocation0 [shape = 'u32[]', space=smem, size = 0x4, offset = 0x4, fixed_abs, tag = 'smem constant byte address 0x4 - core index']
  #allocation1 [shape = 'u32[144,128]{1,0:T(1,128)}', space=vmem, size = 0x12000, scoped, tag = 'internal scratch']
  %s0 = inlined_call_operand.hbm [shape: f32[16,128], index: 0, kind: input, shape index: {}]
  %s1 = inlined_call_operand.hbm [shape: f32[16,128], index: 1, kind: output, shape index: {}]
  %s2 = sld [smem:[#allocation0]]
  $region18: #{tpu_custom_call.1} parent=0
    _
  %s4 = ssub.s32 1, %s2
  %s5 = scalar_select 0, %s4, %s2
  $region1: #{tpu_custom_call.1} parent=0
    #allocation2 [shape = 'u8[8192]{0}', space=vmem, size = 0x2000, scoped, tag = 'input window, operand 0, single buffered']
    #allocation3 [shape = 's32[1]{0}', space=sflag, size = 0x4, scoped, tag = 'scoped memory for tpu_custom_call.1']
    #allocation4 [shape = 's32[1]{0}', space=sflag, size = 0x4, scoped, tag = 'scoped memory for tpu_custom_call.1']
    #allocation5 [shape = 'u8[8192]{0}', space=vmem, size = 0x2000, scoped, tag = 'output window, operand 0, single buffered']
    %6 = vsyncpa [#allocation3], 0
    %7 = vsyncpa [#allocation4], 0
    // Predicated region
    $region2: #{tpu_custom_call.1} parent=1 // pred_check
      _
    $region3: #{tpu_custom_call.1} parent=1 // pred_check_branch
      %9 = sbr.rel (0) target = $region5
    $region4: #{tpu_custom_call.1} parent=1 // pred_region
      %s11 = ssub.s32 256, 256
      %12 = vsyncadd [#allocation3], %s11
      %s13 = sshll.u32 [#allocation2], 4
      %s14 = int_to_ptr.vmem [resolvable:$true] %s13
      %19 = dma.hbm_to_vmem [thread:$0]  %s0, 256, %s14, [#allocation3], 128, 128, 8
    $region5: #{tpu_custom_call.1} parent=1 // pred_fallthru
      _
    // Predicated region
    $region6: #{tpu_custom_call.1} parent=1 // pred_check
      _
    $region7: #{tpu_custom_call.1} parent=1 // pred_check_branch
      %21 = sbr.rel (0) target = $region9
    $region8: #{tpu_custom_call.1} parent=1 // pred_region
      %22 = dma.done [#allocation3], 256
    $region9: #{tpu_custom_call.1} parent=1 // pred_fallthru
      _
    %v23 = vld [vmem:[#allocation2] sm:$0xff]
    %v24 = vld [vmem:[#allocation2 + $0x8] sm:$0xff]
    %v25 = vand.u32 2147483647, %v23
    %v26 = vand.u32 2147483647, %v24
    %v27 = vsub.f32 0.0, %v25
    %v28 = vsub.f32 0.0, %v26
    %29 = vst [vmem:[#allocation5] sm:$0xff] %v27
    %30 = vst [vmem:[#allocation5 + $0x8] sm:$0xff] %v28
    // Predicated region
    $region10: #{tpu_custom_call.1} parent=1 // pred_check
      _
    $region11: #{tpu_custom_call.1} parent=1 // pred_check_branch
      %32 = sbr.rel (0) target = $region13
    $region12: #{tpu_custom_call.1} parent=1 // pred_region
      %s34 = ssub.s32 256, 256
      %35 = vsyncadd [#allocation4], %s34
      %s36 = sshll.u32 [#allocation5], 4
      %s37 = int_to_ptr.vmem [resolvable:$true] %s36
      %42 = dma.vmem_to_hbm [thread:$0]  %s37, 256, %s1, [#allocation4], 128, 128, 8
    $region13: #{tpu_custom_call.1} parent=1 // pred_fallthru
      _
    // Predicated region
    $region14: #{tpu_custom_call.1} parent=1 // pred_check
      _
    $region15: #{tpu_custom_call.1} parent=1 // pred_check_branch
      %44 = sbr.rel (0) target = $region17
    $region16: #{tpu_custom_call.1} parent=1 // pred_region
      %45 = dma.done [#allocation4], 256
    $region17: #{tpu_custom_call.1} parent=1 // pred_fallthru
      _
    %46 = vsyncpa [#allocation3], 1
    %47 = vsyncpa [#allocation4], 1

</llo_original>
